<compile_context>
chip_gen: v7x
topology: tpu7x:2x2x1
jax: 0.10.0
libtpu: 0.0.40
codegen_flags: <defaults>
</compile_context>

<pallas_src>
import jax
import jax.numpy as jnp
from jax.experimental import pallas as pl
from jax.experimental.pallas import tpu as pltpu

EPS = 1e-5
_LANES = 128

# Order of the small-parameter rows inside the trailing 8-row block of the slab.
_ROW_G1, _ROW_BE1, _ROW_G2, _ROW_BE2, _ROW_B3, _ROW_A1, _ROW_A2 = range(7)


def _align8(n: int) -> int:
    return -(-n // 8) * 8


def _make_kernel(S, H, A, off_w1, off_w2, off_w3, off_p):
    """Builds the fused MLP kernel with static slab offsets baked in."""

    def kernel(x_ref, slab_ref, o_ref):
        x = x_ref[...]

        # Static, 8-aligned slices of the single packed weight/param slab.
        w1 = slab_ref[off_w1:off_w1 + S, 0:H]          # [S, H]   (w1 pre-transposed)
        w2 = slab_ref[off_w2:off_w2 + H, 0:H]          # [H, H]
        w3 = slab_ref[off_w3:off_w3 + H, 0:A]          # [H, A]
        g1 = slab_ref[off_p + _ROW_G1:off_p + _ROW_G1 + 1, 0:H]
        be1 = slab_ref[off_p + _ROW_BE1:off_p + _ROW_BE1 + 1, 0:H]
        g2 = slab_ref[off_p + _ROW_G2:off_p + _ROW_G2 + 1, 0:H]
        be2 = slab_ref[off_p + _ROW_BE2:off_p + _ROW_BE2 + 1, 0:H]
        b3 = slab_ref[off_p + _ROW_B3:off_p + _ROW_B3 + 1, 0:A]
        # a1/a2 are already replicated across all lanes at prep time, so these
        # [1, H] reads need no cross-lane broadcast on the critical path.
        a1 = slab_ref[off_p + _ROW_A1:off_p + _ROW_A1 + 1, 0:H]
        a2 = slab_ref[off_p + _ROW_A2:off_p + _ROW_A2 + 1, 0:H]

        # ----- layer 1: Linear (bias cancelled by batch-stat BN) + BN + PReLU -----
        h = jnp.dot(x, w1, preferred_element_type=jnp.float32)
        mu = jnp.mean(h, axis=0, keepdims=True)
        var = jnp.maximum(jnp.mean(h * h, axis=0, keepdims=True) - mu * mu, 0.0)
        scale = g1 * jax.lax.rsqrt(var + EPS)
        shift = be1 - mu * scale
        h = h * scale + shift
        h = jnp.where(h >= 0.0, h, a1 * h)                       # PReLU

        # ----- layer 2: Linear (bias cancelled by batch-stat BN) + BN + PReLU -----
        h = jnp.dot(h, w2, preferred_element_type=jnp.float32)
        mu = jnp.mean(h, axis=0, keepdims=True)
        var = jnp.maximum(jnp.mean(h * h, axis=0, keepdims=True) - mu * mu, 0.0)
        scale = g2 * jax.lax.rsqrt(var + EPS)
        shift = be2 - mu * scale
        h = h * scale + shift
        h = jnp.where(h >= 0.0, h, a2 * h)

        # ----- final layer: Linear (bias kept) -----
        out = jnp.dot(h, w3, preferred_element_type=jnp.float32) + b3
        o_ref[...] = out.astype(o_ref.dtype)

    return kernel


def prepare_params(params, num_states, hidden, num_actions):
    """One-time glue: pre-transpose weights and pack EVERYTHING into one slab."""
    S, H, A = num_states, hidden, num_actions
    assert H <= _LANES and A <= _LANES, (
        "hidden_layer_size and num_actions must be <= 128 to fit the lane dim")

    off_w1 = 0
    off_w2 = off_w1 + _align8(S)
    off_w3 = off_w2 + _align8(H)
    off_p = off_w3 + _align8(H)
    rows = off_p + 8                                   # 8-row param block

    slab = jnp.zeros((rows, _LANES), jnp.float32)
    slab = slab.at[off_w1:off_w1 + S, :H].set(jnp.asarray(params["w1"], jnp.float32).T)
    slab = slab.at[off_w2:off_w2 + H, :H].set(jnp.asarray(params["w2"], jnp.float32).T)
    slab = slab.at[off_w3:off_w3 + H, :A].set(jnp.asarray(params["w3"], jnp.float32).T)
    slab = slab.at[off_p + _ROW_G1, :H].set(params["g1"])
    slab = slab.at[off_p + _ROW_BE1, :H].set(params["be1"])
    slab = slab.at[off_p + _ROW_G2, :H].set(params["g2"])
    slab = slab.at[off_p + _ROW_BE2, :H].set(params["be2"])
    slab = slab.at[off_p + _ROW_B3, :A].set(params["b3"])
    # Pre-replicate the shared PReLU slopes across all lanes.
    slab = slab.at[off_p + _ROW_A1, :].set(params["a1"][0])
    slab = slab.at[off_p + _ROW_A2, :].set(params["a2"][0])

    dims = dict(S=S, H=H, A=A,
                off_w1=off_w1, off_w2=off_w2, off_w3=off_w3, off_p=off_p)
    return dict(slab=slab, dims=dims)


def model_forward(x, kparams):
    """x: [B, num_states] f32 -> [B, num_actions] f32 (training-mode BN)."""
    B = x.shape[0]
    d = kparams["dims"]
    S, H, A = d["S"], d["H"], d["A"]
    slab = kparams["slab"]

    kernel = _make_kernel(S, H, A, d["off_w1"], d["off_w2"], d["off_w3"], d["off_p"])
    cost = pl.CostEstimate(
        flops=2 * B * (S * H + H * H + H * A),
        transcendentals=2 * H,                         # two per-feature rsqrts
        bytes_accessed=(x.size + slab.size + B * A) * 4,
    )
    vmem = pl.BlockSpec(memory_space=pltpu.MemorySpace.VMEM)
    return pl.pallas_call(
        kernel,
        out_shape=jax.ShapeDtypeStruct((B, A), jnp.float32),
        in_specs=[vmem, vmem],
        out_specs=vmem,
        cost_estimate=cost,
    )(x, slab)


def init_params(key, num_states, num_actions, hidden):
    """Deterministic synthetic parameters matching the PyTorch module shapes."""
    ks = jax.random.split(key, 3)

    def lin_init(k, out_f, in_f):
        bound = 1.0 / jnp.sqrt(in_f)
        kw, kb = jax.random.split(k)
        w = jax.random.uniform(kw, (out_f, in_f), jnp.float32, -bound, bound)
        b = jax.random.uniform(kb, (out_f,), jnp.float32, -bound, bound)
        return w, b

    w1, b1 = lin_init(ks[0], hidden, num_states)
    w2, b2 = lin_init(ks[1], hidden, hidden)
    w3, b3 = lin_init(ks[2], num_actions, hidden)

    return dict(
        w1=w1, b1=b1,
        g1=jnp.ones((hidden,), jnp.float32), be1=jnp.zeros((hidden,), jnp.float32),
        a1=jnp.full((1,), 0.25, jnp.float32),
        w2=w2, b2=b2,
        g2=jnp.ones((hidden,), jnp.float32), be2=jnp.zeros((hidden,), jnp.float32),
        a2=jnp.full((1,), 0.25, jnp.float32),
        w3=w3, b3=b3,
    )


def _reference(x, p):
    """Pure-JAX reference matching the PyTorch forward exactly (with Linear biases)."""
    def bn(h, g, b):
        mu = jnp.mean(h, axis=0, keepdims=True)
        var = jnp.mean((h - mu) ** 2, axis=0, keepdims=True)    # biased variance
        return (h - mu) / jnp.sqrt(var + EPS) * g + b

    def prelu(h, a):
        return jnp.where(h >= 0, h, a * h)

    h = prelu(bn(x @ p["w1"].T + p["b1"], p["g1"], p["be1"]), p["a1"][0])
    h = prelu(bn(h @ p["w2"].T + p["b2"], p["g2"], p["be2"]), p["a2"][0])
    return h @ p["w3"].T + p["b3"]


if __name__ == "__main__":
    # Small shapes consistent with the module: batch=8, num_states=16,
    # hidden_layer_size=32, num_actions=8.
    B, NUM_STATES, HIDDEN, NUM_ACTIONS = 8, 16, 32, 8

    key = jax.random.PRNGKey(0)
    kx, kp, kbig = jax.random.split(key, 3)
    params = init_params(kp, NUM_STATES, NUM_ACTIONS, HIDDEN)
    kparams = prepare_params(params, NUM_STATES, HIDDEN, NUM_ACTIONS)

    # Base small-batch check.
    x = jax.random.normal(kx, (B, NUM_STATES), jnp.float32)
    out = jax.block_until_ready(model_forward(x, kparams))
    ref = _reference(x, params)
    assert out.shape == (B, NUM_ACTIONS)
    assert jnp.allclose(out, ref, atol=1e-4, rtol=1e-4), "mismatch vs reference (B=8)"

    # Amortized whole-replay-batch call (review item 2): same kernel, one launch.
    BIG_B = 256
    xb = jax.random.normal(kbig, (BIG_B, NUM_STATES), jnp.float32)
    outb = jax.block_until_ready(model_forward(xb, kparams))
    refb = _reference(xb, params)
    assert outb.shape == (BIG_B, NUM_ACTIONS)
    assert jnp.allclose(outb, refb, atol=1e-4, rtol=1e-4), "mismatch vs reference (B=256)"

    print("KERNEL_OK")
</pallas_src>

<mosaic_0001>
module attributes {stable_mosaic.version = 11 : i64} {
  func.func @kernel(%arg0: memref<8x16xf32, #tpu.memory_space<vmem>>, %arg1: memref<88x128xf32, #tpu.memory_space<vmem>>, %arg2: memref<8x8xf32, #tpu.memory_space<vmem>>) attributes {dimension_semantics = [], scalar_prefetch = 0 : i64, scratch_operands = 0 : i64, tpu.core_type = #tpu.core_type<tc>} {
    %c0 = arith.constant 0 : index
    %c0_0 = arith.constant 0 : index
    %0 = vector.load %arg0[%c0, %c0_0] : memref<8x16xf32, #tpu.memory_space<vmem>>, vector<8x16xf32>
    %c0_1 = arith.constant 0 : index
    %c0_2 = arith.constant 0 : index
    %1 = vector.load %arg1[%c0_1, %c0_2] : memref<88x128xf32, #tpu.memory_space<vmem>>, vector<16x32xf32>
    %c16 = arith.constant 16 : index
    %c0_3 = arith.constant 0 : index
    %2 = vector.load %arg1[%c16, %c0_3] : memref<88x128xf32, #tpu.memory_space<vmem>>, vector<32x32xf32>
    %c48 = arith.constant 48 : index
    %c0_4 = arith.constant 0 : index
    %3 = vector.load %arg1[%c48, %c0_4] : memref<88x128xf32, #tpu.memory_space<vmem>>, vector<32x8xf32>
    %c80 = arith.constant 80 : index
    %c0_5 = arith.constant 0 : index
    %4 = vector.load %arg1[%c80, %c0_5] : memref<88x128xf32, #tpu.memory_space<vmem>>, vector<1x32xf32>
    %c81 = arith.constant 81 : index
    %c0_6 = arith.constant 0 : index
    %5 = vector.load %arg1[%c81, %c0_6] : memref<88x128xf32, #tpu.memory_space<vmem>>, vector<1x32xf32>
    %c82 = arith.constant 82 : index
    %c0_7 = arith.constant 0 : index
    %6 = vector.load %arg1[%c82, %c0_7] : memref<88x128xf32, #tpu.memory_space<vmem>>, vector<1x32xf32>
    %c83 = arith.constant 83 : index
    %c0_8 = arith.constant 0 : index
    %7 = vector.load %arg1[%c83, %c0_8] : memref<88x128xf32, #tpu.memory_space<vmem>>, vector<1x32xf32>
    %c84 = arith.constant 84 : index
    %c0_9 = arith.constant 0 : index
    %8 = vector.load %arg1[%c84, %c0_9] : memref<88x128xf32, #tpu.memory_space<vmem>>, vector<1x8xf32>
    %c85 = arith.constant 85 : index
    %c0_10 = arith.constant 0 : index
    %9 = vector.load %arg1[%c85, %c0_10] : memref<88x128xf32, #tpu.memory_space<vmem>>, vector<1x32xf32>
    %c86 = arith.constant 86 : index
    %c0_11 = arith.constant 0 : index
    %10 = vector.load %arg1[%c86, %c0_11] : memref<88x128xf32, #tpu.memory_space<vmem>>, vector<1x32xf32>
    %cst = arith.constant dense<0.000000e+00> : vector<8x32xf32>
    %11 = tpu.matmul %0, %1, %cst {dimension_numbers = #tpu.dot_dimension_numbers<[1], [0], [0], [1], [0, 0, 1, 1], [], []>} : vector<8x16xf32>, vector<16x32xf32>, vector<8x32xf32> -> vector<8x32xf32>
    %cst_12 = arith.constant dense<0.000000e+00> : vector<32xf32>
    %12 = vector.multi_reduction <add>, %11, %cst_12 [0] : vector<8x32xf32> to vector<32xf32>
    %13 = vector.shape_cast %12 : vector<32xf32> to vector<1x32xf32>
    %cst_13 = arith.constant 8.000000e+00 : f32
    %14 = vector.broadcast %cst_13 : f32 to vector<1x32xf32>
    %15 = arith.divf %13, %14 : vector<1x32xf32>
    %16 = arith.mulf %11, %11 : vector<8x32xf32>
    %cst_14 = arith.constant dense<0.000000e+00> : vector<32xf32>
    %17 = vector.multi_reduction <add>, %16, %cst_14 [0] : vector<8x32xf32> to vector<32xf32>
    %18 = vector.shape_cast %17 : vector<32xf32> to vector<1x32xf32>
    %cst_15 = arith.constant 8.000000e+00 : f32
    %19 = vector.broadcast %cst_15 : f32 to vector<1x32xf32>
    %20 = arith.divf %18, %19 : vector<1x32xf32>
    %21 = arith.mulf %15, %15 : vector<1x32xf32>
    %22 = arith.subf %20, %21 : vector<1x32xf32>
    %cst_16 = arith.constant 0.000000e+00 : f32
    %23 = vector.broadcast %cst_16 : f32 to vector<1x32xf32>
    %24 = arith.maximumf %22, %23 : vector<1x32xf32>
    %cst_17 = arith.constant 9.99999974E-6 : f32
    %25 = vector.broadcast %cst_17 : f32 to vector<1x32xf32>
    %26 = arith.addf %24, %25 : vector<1x32xf32>
    %27 = math.rsqrt %26 : vector<1x32xf32>
    %28 = arith.mulf %4, %27 : vector<1x32xf32>
    %29 = arith.mulf %15, %28 : vector<1x32xf32>
    %30 = arith.subf %5, %29 : vector<1x32xf32>
    %31 = vector.broadcast %28 : vector<1x32xf32> to vector<8x32xf32>
    %32 = arith.mulf %11, %31 : vector<8x32xf32>
    %33 = vector.broadcast %30 : vector<1x32xf32> to vector<8x32xf32>
    %34 = arith.addf %32, %33 : vector<8x32xf32>
    %cst_18 = arith.constant 0.000000e+00 : f32
    %35 = vector.broadcast %cst_18 : f32 to vector<8x32xf32>
    %36 = arith.cmpf oge, %34, %35 : vector<8x32xf32>
    %37 = vector.broadcast %9 : vector<1x32xf32> to vector<8x32xf32>
    %38 = arith.mulf %37, %34 : vector<8x32xf32>
    %39 = arith.select %36, %34, %38 : vector<8x32xi1>, vector<8x32xf32>
    %cst_19 = arith.constant dense<0.000000e+00> : vector<8x32xf32>
    %40 = tpu.matmul %39, %2, %cst_19 {dimension_numbers = #tpu.dot_dimension_numbers<[1], [0], [0], [1], [0, 0, 1, 1], [], []>} : vector<8x32xf32>, vector<32x32xf32>, vector<8x32xf32> -> vector<8x32xf32>
    %cst_20 = arith.constant dense<0.000000e+00> : vector<32xf32>
    %41 = vector.multi_reduction <add>, %40, %cst_20 [0] : vector<8x32xf32> to vector<32xf32>
    %42 = vector.shape_cast %41 : vector<32xf32> to vector<1x32xf32>
    %cst_21 = arith.constant 8.000000e+00 : f32
    %43 = vector.broadcast %cst_21 : f32 to vector<1x32xf32>
    %44 = arith.divf %42, %43 : vector<1x32xf32>
    %45 = arith.mulf %40, %40 : vector<8x32xf32>
    %cst_22 = arith.constant dense<0.000000e+00> : vector<32xf32>
    %46 = vector.multi_reduction <add>, %45, %cst_22 [0] : vector<8x32xf32> to vector<32xf32>
    %47 = vector.shape_cast %46 : vector<32xf32> to vector<1x32xf32>
    %cst_23 = arith.constant 8.000000e+00 : f32
    %48 = vector.broadcast %cst_23 : f32 to vector<1x32xf32>
    %49 = arith.divf %47, %48 : vector<1x32xf32>
    %50 = arith.mulf %44, %44 : vector<1x32xf32>
    %51 = arith.subf %49, %50 : vector<1x32xf32>
    %cst_24 = arith.constant 0.000000e+00 : f32
    %52 = vector.broadcast %cst_24 : f32 to vector<1x32xf32>
    %53 = arith.maximumf %51, %52 : vector<1x32xf32>
    %cst_25 = arith.constant 9.99999974E-6 : f32
    %54 = vector.broadcast %cst_25 : f32 to vector<1x32xf32>
    %55 = arith.addf %53, %54 : vector<1x32xf32>
    %56 = math.rsqrt %55 : vector<1x32xf32>
    %57 = arith.mulf %6, %56 : vector<1x32xf32>
    %58 = arith.mulf %44, %57 : vector<1x32xf32>
    %59 = arith.subf %7, %58 : vector<1x32xf32>
    %60 = vector.broadcast %57 : vector<1x32xf32> to vector<8x32xf32>
    %61 = arith.mulf %40, %60 : vector<8x32xf32>
    %62 = vector.broadcast %59 : vector<1x32xf32> to vector<8x32xf32>
    %63 = arith.addf %61, %62 : vector<8x32xf32>
    %cst_26 = arith.constant 0.000000e+00 : f32
    %64 = vector.broadcast %cst_26 : f32 to vector<8x32xf32>
    %65 = arith.cmpf oge, %63, %64 : vector<8x32xf32>
    %66 = vector.broadcast %10 : vector<1x32xf32> to vector<8x32xf32>
    %67 = arith.mulf %66, %63 : vector<8x32xf32>
    %68 = arith.select %65, %63, %67 : vector<8x32xi1>, vector<8x32xf32>
    %cst_27 = arith.constant dense<0.000000e+00> : vector<8x8xf32>
    %69 = tpu.matmul %68, %3, %cst_27 {dimension_numbers = #tpu.dot_dimension_numbers<[1], [0], [0], [1], [0, 0, 1, 1], [], []>} : vector<8x32xf32>, vector<32x8xf32>, vector<8x8xf32> -> vector<8x8xf32>
    %70 = vector.broadcast %8 : vector<1x8xf32> to vector<8x8xf32>
    %71 = arith.addf %69, %70 : vector<8x8xf32>
    %c0_28 = arith.constant 0 : index
    %c0_29 = arith.constant 0 : index
    %72 = vector.load %arg2[%c0_28, %c0_29] : memref<8x8xf32, #tpu.memory_space<vmem>>, vector<8x8xf32>
    tpu.vector_store %arg2[%c0_28, %c0_29], %71 {strides = array<i32>} : memref<8x8xf32, #tpu.memory_space<vmem>>, vector<8x8xf32>,
    return
  }
}

</mosaic_0001>

<llo_original>
// kernel: tpu_custom_call.1
$region0: #{tpu_custom_call.1}
  #allocation0 [shape = 'u32[]', space=smem, size = 0x4, offset = 0x4, fixed_abs, tag = 'smem constant byte address 0x4 - core index']
  #allocation1 [shape = 'u32[144,128]{1,0:T(1,128)}', space=vmem, size = 0x12000, scoped, tag = 'internal scratch']
  %s0 = inlined_call_operand.hbm [shape: f32[8,16], index: 0, kind: input, shape index: {}]
  %s1 = inlined_call_operand.hbm [shape: f32[88,128], index: 1, kind: input, shape index: {}]
  %s2 = inlined_call_operand.hbm [shape: f32[8,8], index: 2, kind: output, shape index: {}]
  %s3 = sld [smem:[#allocation0]]
  $region26: #{tpu_custom_call.1} parent=0
    _
  %s5 = ssub.s32 1, %s3
  %s6 = scalar_select 0, %s5, %s3
  $region1: #{tpu_custom_call.1} parent=0
    #allocation2 [shape = 'u8[4096]{0}', space=vmem, size = 0x1000, scoped, tag = 'input window, operand 0, single buffered']
    #allocation3 [shape = 's32[1]{0}', space=sflag, size = 0x4, scoped, tag = 'scoped memory for tpu_custom_call.1']
    #allocation4 [shape = 's32[1]{0}', space=sflag, size = 0x4, scoped, tag = 'scoped memory for tpu_custom_call.1']
    #allocation5 [shape = 'u8[45056]{0}', space=vmem, size = 0xb000, scoped, tag = 'input window, operand 1, single buffered']
    #allocation6 [shape = 's32[1]{0}', space=sflag, size = 0x4, scoped, tag = 'scoped memory for tpu_custom_call.1']
    #allocation7 [shape = 'u8[4096]{0}', space=vmem, size = 0x1000, scoped, tag = 'output window, operand 0, single buffered']
    %7 = vsyncpa [#allocation3], 0
    %8 = vsyncpa [#allocation6], 0
    %9 = vsyncpa [#allocation4], 0
    // Predicated region
    $region2: #{tpu_custom_call.1} parent=1 // pred_check
      _
    $region3: #{tpu_custom_call.1} parent=1 // pred_check_branch
      %11 = sbr.rel (0) target = $region5
    $region4: #{tpu_custom_call.1} parent=1 // pred_region
      %s13 = ssub.s32 128, 128
      %14 = vsyncadd [#allocation3], %s13
      %s16 = sshll.u32 [#allocation2], 4
      %s17 = int_to_ptr.vmem [resolvable:$true] %s16
      %19 = dma.hbm_to_vmem [thread:$0]  %s0, 128, %s17, [#allocation3]
    $region5: #{tpu_custom_call.1} parent=1 // pred_fallthru
      _
    // Predicated region
    $region6: #{tpu_custom_call.1} parent=1 // pred_check
      _
    $region7: #{tpu_custom_call.1} parent=1 // pred_check_branch
      %21 = sbr.rel (0) target = $region9
    $region8: #{tpu_custom_call.1} parent=1 // pred_region
      %s23 = ssub.s32 1408, 1408
      %24 = vsyncadd [#allocation6], %s23
      %s25 = sshll.u32 [#allocation5], 4
      %s26 = int_to_ptr.vmem [resolvable:$true] %s25
      %31 = dma.hbm_to_vmem [thread:$0]  %s1, 1408, %s26, [#allocation6], 128, 128, 8
    $region9: #{tpu_custom_call.1} parent=1 // pred_fallthru
      _
    // Predicated region
    $region10: #{tpu_custom_call.1} parent=1 // pred_check
      _
    $region11: #{tpu_custom_call.1} parent=1 // pred_check_branch
      %33 = sbr.rel (0) target = $region13
    $region12: #{tpu_custom_call.1} parent=1 // pred_region
      %34 = dma.done [#allocation3], 128
    $region13: #{tpu_custom_call.1} parent=1 // pred_fallthru
      _
    // Predicated region
    $region14: #{tpu_custom_call.1} parent=1 // pred_check
      _
    $region15: #{tpu_custom_call.1} parent=1 // pred_check_branch
      %36 = sbr.rel (0) target = $region17
    $region16: #{tpu_custom_call.1} parent=1 // pred_region
      %37 = dma.done [#allocation6], 1408
    $region17: #{tpu_custom_call.1} parent=1 // pred_fallthru
      _
    %v38 = vld [vmem:[#allocation2] sm:$0xff]
    %v39 = vld [vmem:[#allocation5] sm:$0xff]
    %v40 = vld [vmem:[#allocation5 + $0x8] sm:$0xff]
    %v41 = vld [vmem:[#allocation5 + $0x10] sm:$0xff]
    %v42 = vld [vmem:[#allocation5 + $0x18] sm:$0xff]
    %v43 = vld [vmem:[#allocation5 + $0x20] sm:$0xff]
    %v44 = vld [vmem:[#allocation5 + $0x28] sm:$0xff]
    %v45 = vld [vmem:[#allocation5 + $0x30] sm:$0xff]
    %v46 = vld [vmem:[#allocation5 + $0x38] sm:$0xff]
    %v47 = vld [vmem:[#allocation5 + $0x40] sm:$0xff]
    %v48 = vld [vmem:[#allocation5 + $0x48] sm:$0xff]
    %v49 = vld [vmem:[#allocation5 + $0x50] sm:$0x1]
    %v50 = vld [vmem:[#allocation5 + $0x51] sm:$0x1]
    %v51 = vld [vmem:[#allocation5 + $0x52] sm:$0x1]
    %v52 = vld [vmem:[#allocation5 + $0x53] sm:$0x1]
    %v53 = vld [vmem:[#allocation5 + $0x54] sm:$0x1]
    %v54 = vld [vmem:[#allocation5 + $0x55] sm:$0x1]
    %v55 = vld [vmem:[#allocation5 + $0x56] sm:$0x1]
    %vm56 = vcmask 130048
    %v58 = vsel %vm56, %v38, 0
    %60 = vmatprep.subr.mxu0 0.0
    %61 = vmatpush1.msra.mxu0 %v39
    %62 = vmatprep.subr.mxu0 0.0
    %63 = vmatpush1.msra.mxu0 %v40
    %64 = vmatprep.subr.mxu0 0.0
    %65 = vmatpush1.msra.mxu0 0.0
    %66 = vmatprep.subr.mxu0 0.0
    %67 = vmatpush1.msra.mxu0 0.0
    %68 = vmatprep.subr.mxu0 0.0
    %69 = vmatpush1.msra.mxu0 0.0
    %70 = vmatprep.subr.mxu0 0.0
    %71 = vmatpush1.msra.mxu0 0.0
    %72 = vmatprep.subr.mxu0 0.0
    %73 = vmatpush1.msra.mxu0 0.0
    %74 = vmatprep.subr.mxu0 0.0
    %75 = vmatpush1.msra.mxu0 0.0
    %76 = vmatprep.subr.mxu0 0.0
    %77 = vmatpush1.msra.mxu0 0.0
    %78 = vmatprep.subr.mxu0 0.0
    %79 = vmatpush1.msra.mxu0 0.0
    %80 = vmatprep.subr.mxu0 0.0
    %81 = vmatpush1.msra.mxu0 0.0
    %82 = vmatprep.subr.mxu0 0.0
    %83 = vmatpush1.msra.mxu0 0.0
    %84 = vmatprep.subr.mxu0 0.0
    %85 = vmatpush1.msra.mxu0 0.0
    %86 = vmatprep.subr.mxu0 0.0
    %87 = vmatpush1.msra.mxu0 0.0
    %88 = vmatprep.subr.mxu0 0.0
    %89 = vmatpush1.msra.mxu0 0.0
    %90 = vmatprep.subr.mxu0 0.0
    %91 = vmatpush1.msra.mxu0 0.0
    %92 = vmatprep.subr.mxu0 0.0
    %93 = vmatpush1.msra.mxu0 0.0
    %94 = vmatprep.subr.mxu0 0.0
    %95 = vmatpush1.msra.mxu0 0.0
    %96 = vmatprep.subr.mxu0 0.0
    %97 = vmatpush1.msra.mxu0 0.0
    %98 = vmatprep.subr.mxu0 0.0
    %99 = vmatpush1.msra.mxu0 0.0
    %100 = vmatprep.subr.mxu0 0.0
    %101 = vmatpush1.msra.mxu0 0.0
    %102 = vmatprep.subr.mxu0 0.0
    %103 = vmatpush1.msra.mxu0 0.0
    %104 = vmatprep.subr.mxu0 0.0
    %105 = vmatpush1.msra.mxu0 0.0
    %106 = vmatprep.subr.mxu0 0.0
    %107 = vmatpush1.msra.mxu0 0.0
    %108 = vmatprep.subr.mxu0 0.0
    %109 = vmatpush1.msra.mxu0 0.0
    %110 = vmatprep.subr.mxu0 0.0
    %111 = vmatpush1.msra.mxu0 0.0
    %112 = vmatprep.subr.mxu0 0.0
    %113 = vmatpush1.msra.mxu0 0.0
    %114 = vmatprep.subr.mxu0 0.0
    %115 = vmatpush1.msra.mxu0 0.0
    %116 = vmatprep.subr.mxu0 0.0
    %117 = vmatpush1.msra.mxu0 0.0
    %118 = vmatprep.subr.mxu0 0.0
    %119 = vmatpush1.msra.mxu0 0.0
    %120 = vmatprep.subr.mxu0 0.0
    %121 = vmatpush1.msra.mxu0 0.0
    %122 = vmatprep.subr.mxu0 0.0
    %123 = vmatpush1.msra.mxu0 0.0
    %124 = vmatprep.mubr.f32.mxu0 0.0
    %125 = vmatmul.mubr.f32.gmra.mrb[0].mxu0 %v58
    %v126 = vpop.f32.mrb[0].mxu0
    %v127 = vadd.f32 0.0, %v126
    %v128 = vpop.f32.mrb[0].mxu0
    %129 = vdwg.mxu0
    %vm130 = vcmask 261120
    %v131 = vsel %vm130, %v127, 0.0
    %v132 = vrot.slane %v131, 4
    %v133 = vadd.f32 %v131, %v132
    %v134 = vrot.slane %v133, 2
    %v135 = vadd.f32 %v133, %v134
    %v136 = vrot.slane %v135, 1
    %v137 = vadd.f32 %v135, %v136
    %v138 = vrcp.pop 8.0
    %v139 = vmul.f32 %v137, %v138
    %v140 = vmul.f32 %v127, %v127
    %v141 = vsel %vm130, %v140, 0.0
    %v142 = vrot.slane %v141, 4
    %v143 = vadd.f32 %v141, %v142
    %v144 = vrot.slane %v143, 2
    %v145 = vadd.f32 %v143, %v144
    %v146 = vrot.slane %v145, 1
    %v147 = vadd.f32 %v145, %v146
    %v148 = vmul.f32 %v147, %v138
    %v149 = vmul.f32 %v139, %v139
    %v150 = vsub.f32 %v148, %v149
    %v151 = vmax.f32 %v150, 0.0
    %v152 = vadd.f32 %v151, 1e-05
    %v153 = vrsqrt.pop %v152
    %v154 = vmul.f32 %v49, %v153
    %v155 = vmul.f32 %v139, %v154
    %v156 = vsub.f32 %v50, %v155
    %v157 = vlaneseq
    %v158 = vshrl.u32 %v157, 7
    %v159 = vsub.s32 0, %v158
    %v160 = vrot.slane %v154, %v159
    %v161 = vmul.f32 %v127, %v160
    %v162 = vlaneseq
    %v163 = vshrl.u32 %v162, 7
    %v164 = vsub.s32 0, %v163
    %v165 = vrot.slane %v156, %v164
    %v166 = vadd.f32 %v161, %v165
    %vm167 = vcmp.ge.f32.partialorder %v166, 0.0
    %v168 = vlaneseq
    %v169 = vshrl.u32 %v168, 7
    %v170 = vsub.s32 0, %v169
    %v171 = vrot.slane %v54, %v170
    %v172 = vmul.f32 %v171, %v166
    %v173 = vsel %vm167, %v166, %v172
    %v175 = vsel %vm130, %v173, 0
    %177 = vmatprep.subr.mxu0 0.0
    %178 = vmatpush1.msra.mxu0 %v41
    %179 = vmatprep.subr.mxu0 0.0
    %180 = vmatpush1.msra.mxu0 %v42
    %181 = vmatprep.subr.mxu0 0.0
    %182 = vmatpush1.msra.mxu0 %v43
    %183 = vmatprep.subr.mxu0 0.0
    %184 = vmatpush1.msra.mxu0 %v44
    %185 = vmatprep.subr.mxu0 0.0
    %186 = vmatpush1.msra.mxu0 0.0
    %187 = vmatprep.subr.mxu0 0.0
    %188 = vmatpush1.msra.mxu0 0.0
    %189 = vmatprep.subr.mxu0 0.0
    %190 = vmatpush1.msra.mxu0 0.0
    %191 = vmatprep.subr.mxu0 0.0
    %192 = vmatpush1.msra.mxu0 0.0
    %193 = vmatprep.subr.mxu0 0.0
    %194 = vmatpush1.msra.mxu0 0.0
    %195 = vmatprep.subr.mxu0 0.0
    %196 = vmatpush1.msra.mxu0 0.0
    %197 = vmatprep.subr.mxu0 0.0
    %198 = vmatpush1.msra.mxu0 0.0
    %199 = vmatprep.subr.mxu0 0.0
    %200 = vmatpush1.msra.mxu0 0.0
    %201 = vmatprep.subr.mxu0 0.0
    %202 = vmatpush1.msra.mxu0 0.0
    %203 = vmatprep.subr.mxu0 0.0
    %204 = vmatpush1.msra.mxu0 0.0
    %205 = vmatprep.subr.mxu0 0.0
    %206 = vmatpush1.msra.mxu0 0.0
    %207 = vmatprep.subr.mxu0 0.0
    %208 = vmatpush1.msra.mxu0 0.0
    %209 = vmatprep.subr.mxu0 0.0
    %210 = vmatpush1.msra.mxu0 0.0
    %211 = vmatprep.subr.mxu0 0.0
    %212 = vmatpush1.msra.mxu0 0.0
    %213 = vmatprep.subr.mxu0 0.0
    %214 = vmatpush1.msra.mxu0 0.0
    %215 = vmatprep.subr.mxu0 0.0
    %216 = vmatpush1.msra.mxu0 0.0
    %217 = vmatprep.subr.mxu0 0.0
    %218 = vmatpush1.msra.mxu0 0.0
    %219 = vmatprep.subr.mxu0 0.0
    %220 = vmatpush1.msra.mxu0 0.0
    %221 = vmatprep.subr.mxu0 0.0
    %222 = vmatpush1.msra.mxu0 0.0
    %223 = vmatprep.subr.mxu0 0.0
    %224 = vmatpush1.msra.mxu0 0.0
    %225 = vmatprep.subr.mxu0 0.0
    %226 = vmatpush1.msra.mxu0 0.0
    %227 = vmatprep.subr.mxu0 0.0
    %228 = vmatpush1.msra.mxu0 0.0
    %229 = vmatprep.subr.mxu0 0.0
    %230 = vmatpush1.msra.mxu0 0.0
    %231 = vmatprep.subr.mxu0 0.0
    %232 = vmatpush1.msra.mxu0 0.0
    %233 = vmatprep.subr.mxu0 0.0
    %234 = vmatpush1.msra.mxu0 0.0
    %235 = vmatprep.subr.mxu0 0.0
    %236 = vmatpush1.msra.mxu0 0.0
    %237 = vmatprep.subr.mxu0 0.0
    %238 = vmatpush1.msra.mxu0 0.0
    %239 = vmatprep.subr.mxu0 0.0
    %240 = vmatpush1.msra.mxu0 0.0
    %241 = vmatprep.mubr.f32.mxu0 0.0
    %242 = vmatmul.mubr.f32.gmra.mrb[0].mxu0 %v175
    %v243 = vpop.f32.mrb[0].mxu0
    %v244 = vadd.f32 0.0, %v243
    %v245 = vpop.f32.mrb[0].mxu0
    %246 = vdwg.mxu0
    %v247 = vsel %vm130, %v244, 0.0
    %v248 = vrot.slane %v247, 4
    %v249 = vadd.f32 %v247, %v248
    %v250 = vrot.slane %v249, 2
    %v251 = vadd.f32 %v249, %v250
    %v252 = vrot.slane %v251, 1
    %v253 = vadd.f32 %v251, %v252
    %v254 = vmul.f32 %v253, %v138
    %v255 = vmul.f32 %v244, %v244
    %v256 = vsel %vm130, %v255, 0.0
    %v257 = vrot.slane %v256, 4
    %v258 = vadd.f32 %v256, %v257
    %v259 = vrot.slane %v258, 2
    %v260 = vadd.f32 %v258, %v259
    %v261 = vrot.slane %v260, 1
    %v262 = vadd.f32 %v260, %v261
    %v263 = vmul.f32 %v262, %v138
    %v264 = vmul.f32 %v254, %v254
    %v265 = vsub.f32 %v263, %v264
    %v266 = vmax.f32 %v265, 0.0
    %v267 = vadd.f32 %v266, 1e-05
    %v268 = vrsqrt.pop %v267
    %v269 = vmul.f32 %v51, %v268
    %v270 = vmul.f32 %v254, %v269
    %v271 = vsub.f32 %v52, %v270
    %v272 = vlaneseq
    %v273 = vshrl.u32 %v272, 7
    %v274 = vsub.s32 0, %v273
    %v275 = vrot.slane %v269, %v274
    %v276 = vmul.f32 %v244, %v275
    %v277 = vlaneseq
    %v278 = vshrl.u32 %v277, 7
    %v279 = vsub.s32 0, %v278
    %v280 = vrot.slane %v271, %v279
    %v281 = vadd.f32 %v276, %v280
    %vm282 = vcmp.ge.f32.partialorder %v281, 0.0
    %v283 = vlaneseq
    %v284 = vshrl.u32 %v283, 7
    %v285 = vsub.s32 0, %v284
    %v286 = vrot.slane %v55, %v285
    %v287 = vmul.f32 %v286, %v281
    %v288 = vsel %vm282, %v281, %v287
    %v289 = vlaneseq
    %v290 = vshrl.u32 %v289, 7
    %v291 = vsub.s32 0, %v290
    %v292 = vrot.slane %v53, %v291
    %v294 = vsel %vm130, %v288, 0
    %296 = vmatprep.subr.mxu0 0.0
    %297 = vmatpush1.msra.mxu0 %v45
    %298 = vmatprep.subr.mxu0 0.0
    %299 = vmatpush1.msra.mxu0 %v46
    %300 = vmatprep.subr.mxu0 0.0
    %301 = vmatpush1.msra.mxu0 %v47
    %302 = vmatprep.subr.mxu0 0.0
    %303 = vmatpush1.msra.mxu0 %v48
    %304 = vmatprep.subr.mxu0 0.0
    %305 = vmatpush1.msra.mxu0 0.0
    %306 = vmatprep.subr.mxu0 0.0
    %307 = vmatpush1.msra.mxu0 0.0
    %308 = vmatprep.subr.mxu0 0.0
    %309 = vmatpush1.msra.mxu0 0.0
    %310 = vmatprep.subr.mxu0 0.0
    %311 = vmatpush1.msra.mxu0 0.0
    %312 = vmatprep.subr.mxu0 0.0
    %313 = vmatpush1.msra.mxu0 0.0
    %314 = vmatprep.subr.mxu0 0.0
    %315 = vmatpush1.msra.mxu0 0.0
    %316 = vmatprep.subr.mxu0 0.0
    %317 = vmatpush1.msra.mxu0 0.0
    %318 = vmatprep.subr.mxu0 0.0
    %319 = vmatpush1.msra.mxu0 0.0
    %320 = vmatprep.subr.mxu0 0.0
    %321 = vmatpush1.msra.mxu0 0.0
    %322 = vmatprep.subr.mxu0 0.0
    %323 = vmatpush1.msra.mxu0 0.0
    %324 = vmatprep.subr.mxu0 0.0
    %325 = vmatpush1.msra.mxu0 0.0
    %326 = vmatprep.subr.mxu0 0.0
    %327 = vmatpush1.msra.mxu0 0.0
    %328 = vmatprep.subr.mxu0 0.0
    %329 = vmatpush1.msra.mxu0 0.0
    %330 = vmatprep.subr.mxu0 0.0
    %331 = vmatpush1.msra.mxu0 0.0
    %332 = vmatprep.subr.mxu0 0.0
    %333 = vmatpush1.msra.mxu0 0.0
    %334 = vmatprep.subr.mxu0 0.0
    %335 = vmatpush1.msra.mxu0 0.0
    %336 = vmatprep.subr.mxu0 0.0
    %337 = vmatpush1.msra.mxu0 0.0
    %338 = vmatprep.subr.mxu0 0.0
    %339 = vmatpush1.msra.mxu0 0.0
    %340 = vmatprep.subr.mxu0 0.0
    %341 = vmatpush1.msra.mxu0 0.0
    %342 = vmatprep.subr.mxu0 0.0
    %343 = vmatpush1.msra.mxu0 0.0
    %344 = vmatprep.subr.mxu0 0.0
    %345 = vmatpush1.msra.mxu0 0.0
    %346 = vmatprep.subr.mxu0 0.0
    %347 = vmatpush1.msra.mxu0 0.0
    %348 = vmatprep.subr.mxu0 0.0
    %349 = vmatpush1.msra.mxu0 0.0
    %350 = vmatprep.subr.mxu0 0.0
    %351 = vmatpush1.msra.mxu0 0.0
    %352 = vmatprep.subr.mxu0 0.0
    %353 = vmatpush1.msra.mxu0 0.0
    %354 = vmatprep.subr.mxu0 0.0
    %355 = vmatpush1.msra.mxu0 0.0
    %356 = vmatprep.subr.mxu0 0.0
    %357 = vmatpush1.msra.mxu0 0.0
    %358 = vmatprep.subr.mxu0 0.0
    %359 = vmatpush1.msra.mxu0 0.0
    %360 = vmatprep.mubr.f32.mxu0 0.0
    %361 = vmatmul.mubr.f32.gmra.mrb[0].mxu0 %v294
    %v362 = vpop.f32.mrb[0].mxu0
    %v363 = vadd.f32 %v292, %v362
    %v364 = vpop.f32.mrb[0].mxu0
    %365 = vdwg.mxu0
    %vm366 = vcmask 64512
    %367 = vst.msk [vmem:[#allocation7] sm:$0xff] %vm366, %v363
    // Predicated region
    $region18: #{tpu_custom_call.1} parent=1 // pred_check
      _
    $region19: #{tpu_custom_call.1} parent=1 // pred_check_branch
      %369 = sbr.rel (0) target = $region21
    $region20: #{tpu_custom_call.1} parent=1 // pred_region
      %s371 = ssub.s32 128, 128
      %372 = vsyncadd [#allocation4], %s371
      %s374 = sshll.u32 [#allocation7], 4
      %s375 = int_to_ptr.vmem [resolvable:$true] %s374
      %377 = dma.vmem_to_hbm [thread:$0]  %s375, 128, %s2, [#allocation4]
    $region21: #{tpu_custom_call.1} parent=1 // pred_fallthru
      _
    // Predicated region
    $region22: #{tpu_custom_call.1} parent=1 // pred_check
      _
    $region23: #{tpu_custom_call.1} parent=1 // pred_check_branch
      %379 = sbr.rel (0) target = $region25
    $region24: #{tpu_custom_call.1} parent=1 // pred_region
      %380 = dma.done [#allocation4], 128
    $region25: #{tpu_custom_call.1} parent=1 // pred_fallthru
      _
    %381 = vsyncpa [#allocation3], 1
    %382 = vsyncpa [#allocation6], 1
    %383 = vsyncpa [#allocation4], 1

</llo_original>
